<compile_context>
chip_gen: v5e
topology: v5e:2x2
jax: 0.10.0
libtpu: 0.0.40
codegen_flags: <defaults>
</compile_context>

<pallas_src>
import functools
import math

import jax
import jax.numpy as jnp
from jax.experimental import pallas as pl
from jax.experimental.pallas import tpu as pltpu


def _channel_attention_kernel(x_ref, w1_ref, w2_ref, o_ref, *, inv_hw):
    """One batch element: pool + conv1(1x1) + ReLU + conv2(1x1) + add + sigmoid."""
    x = x_ref[0]                                          # [C, HW]  (f32)
    # Global average / max pooling: lane-axis reductions (XLU), one pass over x.
    avg = jnp.sum(x, axis=-1, keepdims=True) * inv_hw     # [C, 1]
    mx = jnp.max(x, axis=-1, keepdims=True)               # [C, 1]
    pooled = jnp.concatenate([avg, mx], axis=-1)          # [C, 2]: avg | max columns
    # Shared MLP, both branches in a single pair of matmuls (f32 accumulate).
    h = jnp.dot(w1_ref[...], pooled, preferred_element_type=jnp.float32)   # [Cmid, 2]
    h = jnp.maximum(h, 0.0)                               # ReLU
    y = jnp.dot(w2_ref[...], h, preferred_element_type=jnp.float32)        # [C, 2]
    att = jax.nn.sigmoid(y[:, 0:1] + y[:, 1:2])           # [C, 1]
    o_ref[0] = att


@jax.jit
def channel_attention_forward(x_nchw, w1, w2):
    """ChannelAttention.forward.

    x_nchw: [B, C, H, W]  (PyTorch NCHW layout)
    w1:     [Cmid, C]     (Conv2d(C,    Cmid, 1, bias=False).weight, squeezed)
    w2:     [C, Cmid]     (Conv2d(Cmid, C,    1, bias=False).weight, squeezed)
    returns [B, C, 1, 1]
    """
    B, C, H, W = x_nchw.shape
    HW = H * W
    cmid = w1.shape[0]
    x = x_nchw.reshape(B, C, HW)                          # free reshape (H, W contiguous)
    kern = functools.partial(_channel_attention_kernel, inv_hw=1.0 / HW)
    out = pl.pallas_call(
        kern,
        out_shape=jax.ShapeDtypeStruct((B, C, 1), jnp.float32),
        grid_spec=pltpu.PrefetchScalarGridSpec(
            num_scalar_prefetch=0,
            grid=(B,),
            in_specs=[pl.BlockSpec((1, C, HW), lambda b: (b, 0, 0)),
                      pl.BlockSpec((cmid, C), lambda b: (0, 0)),
                      pl.BlockSpec((C, cmid), lambda b: (0, 0))],
            out_specs=pl.BlockSpec((1, C, 1), lambda b: (b, 0, 0)),
        ),
        compiler_params=pltpu.CompilerParams(
            dimension_semantics=("parallel",)),
    )(x, w1, w2)
    return out.reshape(B, C, 1, 1)


def _reference_forward(x_nchw, w1, w2):
    """Pure-JAX reference mirroring the PyTorch module (sanity check only)."""
    avg = jnp.mean(x_nchw, axis=(2, 3))                   # [B, C]
    mx = jnp.max(x_nchw, axis=(2, 3))                     # [B, C]

    def branch(v):
        return jnp.maximum(v @ w1.T, 0.0) @ w2.T

    return jax.nn.sigmoid(branch(avg) + branch(mx))[:, :, None, None]


if __name__ == "__main__":
    key = jax.random.PRNGKey(0)
    k_x, k_w1, k_w2 = jax.random.split(key, 3)

    B, C, H, W = 2, 64, 16, 16
    ratio = 16
    cmid = math.ceil(C / ratio)

    x = jax.random.normal(k_x, (B, C, H, W), jnp.float32)
    w1 = jax.random.normal(k_w1, (cmid, C), jnp.float32) * math.sqrt(2.0 / C)
    w2 = jax.random.normal(k_w2, (C, cmid), jnp.float32) * math.sqrt(2.0 / cmid)

    out = channel_attention_forward(x, w1, w2)
    out = jax.block_until_ready(out)

    assert out.shape == (B, C, 1, 1), out.shape
    assert bool(jnp.all(jnp.isfinite(out)))

    ref = _reference_forward(x, w1, w2)
    err = float(jnp.max(jnp.abs(out - ref)))
    assert err < 1e-5, err

    print("KERNEL_OK")
</pallas_src>

<mosaic_0001>
module attributes {stable_mosaic.version = 11 : i64} {
  func.func @_channel_attention_kernel(%arg0: i32, %arg1: memref<1x64x256xf32, #tpu.memory_space<vmem>>, %arg2: memref<4x64xf32, #tpu.memory_space<vmem>>, %arg3: memref<64x4xf32, #tpu.memory_space<vmem>>, %arg4: memref<1x64x1xf32, #tpu.memory_space<vmem>>) attributes {dimension_semantics = [#tpu.dimension_semantics<parallel>], iteration_bounds = array<i64: 2>, scalar_prefetch = 0 : i64, scratch_operands = 0 : i64, tpu.core_type = #tpu.core_type<tc>, window_params = [{transform_indices = @transform_0, window_bounds = array<i64: 1, 64, 256>}, {pipeline_mode = #tpu.pipeline_mode<synchronous>, transform_indices = @transform_1, window_bounds = array<i64: 4, 64>}, {pipeline_mode = #tpu.pipeline_mode<synchronous>, transform_indices = @transform_2, window_bounds = array<i64: 64, 4>}, {transform_indices = @transform_3, window_bounds = array<i64: 1, 64, 1>}]} {
    %c0 = arith.constant 0 : index
    %c0_0 = arith.constant 0 : index
    %c0_1 = arith.constant 0 : index
    %0 = vector.load %arg1[%c0, %c0_0, %c0_1] : memref<1x64x256xf32, #tpu.memory_space<vmem>>, vector<1x64x256xf32>
    %1 = vector.shape_cast %0 : vector<1x64x256xf32> to vector<64x256xf32>
    %cst = arith.constant dense<0.000000e+00> : vector<64xf32>
    %2 = vector.multi_reduction <add>, %1, %cst [1] : vector<64x256xf32> to vector<64xf32>
    %3 = vector.shape_cast %2 : vector<64xf32> to vector<64x1xf32>
    %cst_2 = arith.constant 3.906250e-03 : f32
    %4 = vector.broadcast %cst_2 : f32 to vector<64x1xf32>
    %5 = arith.mulf %3, %4 : vector<64x1xf32>
    %cst_3 = arith.constant dense<0xFF800000> : vector<64xf32>
    %6 = vector.multi_reduction <maximumf>, %1, %cst_3 [1] : vector<64x256xf32> to vector<64xf32>
    %7 = vector.shape_cast %6 : vector<64xf32> to vector<64x1xf32>
    %8 = tpu.concatenate %5, %7 in 1 : vector<64x1xf32>, vector<64x1xf32> -> vector<64x2xf32>
    %c0_4 = arith.constant 0 : index
    %c0_5 = arith.constant 0 : index
    %9 = vector.load %arg2[%c0_4, %c0_5] : memref<4x64xf32, #tpu.memory_space<vmem>>, vector<4x64xf32>
    %cst_6 = arith.constant dense<0.000000e+00> : vector<4x2xf32>
    %10 = tpu.matmul %9, %8, %cst_6 {dimension_numbers = #tpu.dot_dimension_numbers<[1], [0], [0], [1], [0, 0, 1, 1], [], []>} : vector<4x64xf32>, vector<64x2xf32>, vector<4x2xf32> -> vector<4x2xf32>
    %cst_7 = arith.constant 0.000000e+00 : f32
    %11 = vector.broadcast %cst_7 : f32 to vector<4x2xf32>
    %12 = arith.maximumf %10, %11 : vector<4x2xf32>
    %c0_8 = arith.constant 0 : index
    %c0_9 = arith.constant 0 : index
    %13 = vector.load %arg3[%c0_8, %c0_9] : memref<64x4xf32, #tpu.memory_space<vmem>>, vector<64x4xf32>
    %cst_10 = arith.constant dense<0.000000e+00> : vector<64x2xf32>
    %14 = tpu.matmul %13, %12, %cst_10 {dimension_numbers = #tpu.dot_dimension_numbers<[1], [0], [0], [1], [0, 0, 1, 1], [], []>} : vector<64x4xf32>, vector<4x2xf32>, vector<64x2xf32> -> vector<64x2xf32>
    %15 = vector.extract_strided_slice %14 {offsets = [0, 0], sizes = [64, 1], strides = [1, 1]} : vector<64x2xf32> to vector<64x1xf32>
    %16 = vector.extract_strided_slice %14 {offsets = [0, 1], sizes = [64, 1], strides = [1, 1]} : vector<64x2xf32> to vector<64x1xf32>
    %17 = arith.addf %15, %16 : vector<64x1xf32>
    %18 = arith.negf %17 : vector<64x1xf32>
    %19 = math.exp %18 : vector<64x1xf32>
    %cst_11 = arith.constant 1.000000e+00 : f32
    %20 = vector.broadcast %cst_11 : f32 to vector<64x1xf32>
    %21 = arith.addf %20, %19 : vector<64x1xf32>
    %22 = arith.divf %20, %21 : vector<64x1xf32>
    %c0_12 = arith.constant 0 : index
    %c0_13 = arith.constant 0 : index
    %c0_14 = arith.constant 0 : index
    %23 = vector.load %arg4[%c0_12, %c0_13, %c0_14] : memref<1x64x1xf32, #tpu.memory_space<vmem>>, vector<1x64x1xf32>
    %24 = vector.shape_cast %23 : vector<1x64x1xf32> to vector<64x1xf32>
    %25 = vector.shape_cast %22 : vector<64x1xf32> to vector<1x64x1xf32>
    tpu.vector_store %arg4[%c0_12, %c0_13, %c0_14], %25 {strides = array<i32>} : memref<1x64x1xf32, #tpu.memory_space<vmem>>, vector<1x64x1xf32>,
    return
  }
  func.func @transform_0(%arg0: i32) -> (i32, i32, i32) {
    %c0_i32 = arith.constant 0 : i32
    %c0_i32_0 = arith.constant 0 : i32
    %c0_i32_1 = arith.constant 0 : i32
    return %arg0, %c0_i32, %c0_i32_0 : i32, i32, i32
  }
  func.func @transform_1(%arg0: i32) -> (i32, i32) {
    %c0_i32 = arith.constant 0 : i32
    %c0_i32_0 = arith.constant 0 : i32
    %c0_i32_1 = arith.constant 0 : i32
    return %c0_i32, %c0_i32_0 : i32, i32
  }
  func.func @transform_2(%arg0: i32) -> (i32, i32) {
    %c0_i32 = arith.constant 0 : i32
    %c0_i32_0 = arith.constant 0 : i32
    %c0_i32_1 = arith.constant 0 : i32
    return %c0_i32, %c0_i32_0 : i32, i32
  }
  func.func @transform_3(%arg0: i32) -> (i32, i32, i32) {
    %c0_i32 = arith.constant 0 : i32
    %c0_i32_0 = arith.constant 0 : i32
    %c0_i32_1 = arith.constant 0 : i32
    return %arg0, %c0_i32, %c0_i32_0 : i32, i32, i32
  }
}

</mosaic_0001>

<llo_original>
// kernel: channel_attention_forward.1
$region0: #{channel_attention_forward.1}
  #allocation0 [shape = 'u32[]', space=smem, size = 0x4, offset = 0x4, fixed_abs, tag = 'smem constant byte address 0x4 - core index']
  #allocation1 [shape = 'u32[72,128]{1,0:T(1,128)}', space=vmem, size = 0x9000, scoped, tag = 'internal scratch']
  %s0 = inlined_call_operand.vmem [shape: f32[2,64,256], index: 0, kind: input, shape index: {}]
  %s1 = inlined_call_operand.vmem [shape: f32[4,64], index: 1, kind: input, shape index: {}]
  %s2 = inlined_call_operand.vmem [shape: f32[64,4], index: 2, kind: input, shape index: {}]
  %s3 = inlined_call_operand.vmem [shape: f32[2,64,1], index: 3, kind: output, shape index: {}]
  %s4 = sld [smem:[#allocation0]]
  $region45: #{channel_attention_forward.1} parent=0
    _
  %s6 = ssub.s32 1, %s4
  %s7 = scalar_select 0, %s6, %s4
  loop: start=0, step=1, limit=4
  $region2: #{channel_attention_forward.1} parent=0 // loop_pre_header
    _
  $region3: #{channel_attention_forward.1} parent=0 // loop_header
    %s9 = sphi 0, %s13
    %p10 = scmp.ge.s32.totalorder %s9, 4
    %s19 = sphi 0, %s21
    %s22 = sphi 0, %s19
    %s23 = sphi 0, %s22
    %s39 = sphi 0, %s23
    %s43 = sphi 0, %s43
    %s45 = sphi 0, %s43
    %s46 = sphi 0, %s45
    %s60 = sphi 0, %s46
    %s64 = sphi 0, %s64
    %s66 = sphi 0, %s64
    %s67 = sphi 0, %s66
    %s81 = sphi 0, %s67
    %s87 = sphi 0, %s89
    %s90 = sphi 0, %s87
    %s91 = sphi 0, %s90
    %s107 = sphi 0, %s91
  $region4: #{channel_attention_forward.1} parent=0 // loop_header_branch
    %12 = sbr.rel (%p10) target = $region8
  $region5: #{channel_attention_forward.1} parent=0 // loop_body
    %s14 = ssub.s32 %s9, 1
    %s15 = ssub.s32 %s9, 2
    %s16 = sadd.s32 %s9, 1
    %s17 = ssub.s32 %s9, %s16
    %p18 = scmp.eq.s32.totalorder %s17, 0
    %s20 = sadd.s32 %s19, 1
    %s21 = scalar_select %p18, %s19, %s20
    %p24 = pneg %p18
    %p25 = scmp.eq.s32.totalorder %s9, 1
    %p26 = por %p24, %p25
    %p27 = scmp.ne.s32.totalorder %s19, %s22
    %p28 = scmp.eq.s32.totalorder %s9, 0
    %p29 = por %p27, %p28
    %p30 = scmp.ne.s32.totalorder %s19, %s22
    %p31 = scmp.eq.s32.totalorder %s14, 1
    %p32 = por %p30, %p31
    %p33 = scmp.ne.s32.totalorder %s22, %s23
    %p34 = scmp.eq.s32.totalorder %s14, 0
    %p35 = por %p33, %p34
    %p36 = scmp.ne.s32.totalorder %s22, %s23
    %p37 = scmp.eq.s32.totalorder %s15, 1
    %p38 = por %p36, %p37
    %p40 = scmp.ne.s32.totalorder %s23, %s39
    %p41 = scmp.eq.s32.totalorder %s15, 0
    %p42 = por %p40, %p41
    %s44 = sadd.s32 %s43, 1
    %p47 = scmp.eq.s32.totalorder %s9, 1
    %p48 = scmp.ne.s32.totalorder %s43, %s45
    %p49 = scmp.eq.s32.totalorder %s9, 0
    %p50 = por %p48, %p49
    %p51 = scmp.ne.s32.totalorder %s43, %s45
    %p52 = scmp.eq.s32.totalorder %s14, 1
    %p53 = por %p51, %p52
    %p54 = scmp.ne.s32.totalorder %s45, %s46
    %p55 = scmp.eq.s32.totalorder %s14, 0
    %p56 = por %p54, %p55
    %p57 = scmp.ne.s32.totalorder %s45, %s46
    %p58 = scmp.eq.s32.totalorder %s15, 1
    %p59 = por %p57, %p58
    %p61 = scmp.ne.s32.totalorder %s46, %s60
    %p62 = scmp.eq.s32.totalorder %s15, 0
    %p63 = por %p61, %p62
    %s65 = sadd.s32 %s64, 1
    %p68 = scmp.eq.s32.totalorder %s9, 1
    %p69 = scmp.ne.s32.totalorder %s64, %s66
    %p70 = scmp.eq.s32.totalorder %s9, 0
    %p71 = por %p69, %p70
    %p72 = scmp.ne.s32.totalorder %s64, %s66
    %p73 = scmp.eq.s32.totalorder %s14, 1
    %p74 = por %p72, %p73
    %p75 = scmp.ne.s32.totalorder %s66, %s67
    %p76 = scmp.eq.s32.totalorder %s14, 0
    %p77 = por %p75, %p76
    %p78 = scmp.ne.s32.totalorder %s66, %s67
    %p79 = scmp.eq.s32.totalorder %s15, 1
    %p80 = por %p78, %p79
    %p82 = scmp.ne.s32.totalorder %s67, %s81
    %p83 = scmp.eq.s32.totalorder %s15, 0
    %p84 = por %p82, %p83
    %s85 = ssub.s32 %s9, %s16
    %p86 = scmp.eq.s32.totalorder %s85, 0
    %s88 = sadd.s32 %s87, 1
    %s89 = scalar_select %p86, %s87, %s88
    %p92 = pneg %p86
    %p93 = scmp.eq.s32.totalorder %s9, 1
    %p94 = por %p92, %p93
    %p95 = scmp.ne.s32.totalorder %s87, %s90
    %p96 = scmp.eq.s32.totalorder %s9, 0
    %p97 = por %p95, %p96
    %p98 = scmp.ne.s32.totalorder %s87, %s90
    %p99 = scmp.eq.s32.totalorder %s14, 1
    %p100 = por %p98, %p99
    %p101 = scmp.ne.s32.totalorder %s90, %s91
    %p102 = scmp.eq.s32.totalorder %s14, 0
    %p103 = por %p101, %p102
    %p104 = scmp.ne.s32.totalorder %s90, %s91
    %p105 = scmp.eq.s32.totalorder %s15, 1
    %p106 = por %p104, %p105
    %p108 = scmp.ne.s32.totalorder %s91, %s107
    %p109 = scmp.eq.s32.totalorder %s15, 0
    %p110 = por %p108, %p109
    %p111 = scmp.le.s32.totalorder 1, %s9
    %p112 = scmp.lt.s32.totalorder %s9, 3
    %p113 = pnand %p111, %p112
    %p114 = pneg %p113
    // Predicated region
    $region9: #{channel_attention_forward.1} parent=5 // pred_check
      _
    $region10: #{channel_attention_forward.1} parent=5 // pred_check_branch
      %116 = sbr.rel (%p113) target = $region12
    $region11: #{channel_attention_forward.1} parent=5 // pred_region
      %s117 = ssub.s32 %s9, 1
      // Predicated region
      $region13: #{channel_attention_forward.1} parent=11 // pred_check
        %p118 = pneg %p56
      $region14: #{channel_attention_forward.1} parent=11 // pred_check_branch
        %120 = sbr.rel (%p118) target = $region16
      $region15: #{channel_attention_forward.1} parent=11 // pred_region
        _
      $region16: #{channel_attention_forward.1} parent=11 // pred_fallthru
        _
      // Predicated region
      $region17: #{channel_attention_forward.1} parent=11 // pred_check
        %p121 = pneg %p77
      $region18: #{channel_attention_forward.1} parent=11 // pred_check_branch
        %123 = sbr.rel (%p121) target = $region20
      $region19: #{channel_attention_forward.1} parent=11 // pred_region
        _
      $region20: #{channel_attention_forward.1} parent=11 // pred_fallthru
        _
    $region12: #{channel_attention_forward.1} parent=5 // pred_fallthru
      _
    %p124 = scmp.lt.s32.totalorder %s9, 2
    // Predicated region
    $region21: #{channel_attention_forward.1} parent=5 // pred_check
      %p125 = pneg %p124
    $region22: #{channel_attention_forward.1} parent=5 // pred_check_branch
      %127 = sbr.rel (%p125) target = $region24
    $region23: #{channel_attention_forward.1} parent=5 // pred_region
      // Predicated region
      $region25: #{channel_attention_forward.1} parent=23 // pred_check
        %p128 = pneg %p29
      $region26: #{channel_attention_forward.1} parent=23 // pred_check_branch
        %130 = sbr.rel (%p128) target = $region28
      $region27: #{channel_attention_forward.1} parent=23 // pred_region
        %p131 = scmp.lt.s32.totalorder %s9, 1
        %s132 = scalar_select %p131, %s9, 1
        %s133 = smul.addr %s132, 16
        %s134 = smul.addr %s133, 8
        %s135 = scalar_lea.vmem %s0, %s134
      $region28: #{channel_attention_forward.1} parent=23 // pred_fallthru
        _
    $region24: #{channel_attention_forward.1} parent=5 // pred_fallthru
      _
    %p136 = scmp.le.s32.totalorder 1, %s9
    %p137 = scmp.lt.s32.totalorder %s9, 3
    %p138 = pnand %p136, %p137
    %p139 = pneg %p138
    // Predicated region
    $region29: #{channel_attention_forward.1} parent=5 // pred_check
      _
    $region30: #{channel_attention_forward.1} parent=5 // pred_check_branch
      %141 = sbr.rel (%p138) target = $region32
    $region31: #{channel_attention_forward.1} parent=5 // pred_region
      %s142 = ssub.s32 %s9, 1
      %p143 = scmp.lt.s32.totalorder %s14, 1
      %s144 = scalar_select %p143, %s14, 1
      %s145 = smul.addr %s144, 16
      %s146 = smul.addr %s145, 8
      %s147 = scalar_lea.vmem %s0, %s146
      %p148 = pneg %p35
      %p149 = pneg %p32
      %p150 = pneg %p56
      %p151 = pneg %p53
      %p152 = pneg %p77
      %p153 = pneg %p74
      %p154 = pneg %p103
      %p155 = pneg %p100
      %p156 = scmp.lt.s32.totalorder %s14, 1
      %s157 = scalar_select %p156, %s14, 1
      %s158 = smul.addr %s157, 8
      %s159 = smul.addr %s158, 8
      %s160 = scalar_lea.vmem %s3, %s159
      %p161 = scmp.lt.s32.totalorder %s14, 1
      %s162 = scalar_select %p161, %s14, 1
      %s163 = smul.addr %s162, 16
      %s164 = smul.addr %s163, 8
      %s165 = scalar_lea.vmem %s0, %s164
      %p166 = scmp.lt.s32.totalorder %s14, 1
      %s167 = scalar_select %p166, %s14, 1
      %s168 = smul.addr %s167, 8
      %s169 = smul.addr %s168, 8
      %s170 = scalar_lea.vmem %s3, %s169
      %v171 = vld [vmem:[%s165] sm:$0xff]
      %v172 = vld [vmem:[%s165 + $0x8] sm:$0xff]
      %v173 = vld [vmem:[%s165 + $0x10] sm:$0xff]
      %v174 = vld [vmem:[%s165 + $0x18] sm:$0xff]
      %v175 = vld [vmem:[%s165 + $0x20] sm:$0xff]
      %v176 = vld [vmem:[%s165 + $0x28] sm:$0xff]
      %v177 = vld [vmem:[%s165 + $0x30] sm:$0xff]
      %v178 = vld [vmem:[%s165 + $0x38] sm:$0xff]
      %v179 = vld [vmem:[%s165 + $0x40] sm:$0xff]
      %v180 = vld [vmem:[%s165 + $0x48] sm:$0xff]
      %v181 = vld [vmem:[%s165 + $0x50] sm:$0xff]
      %v182 = vld [vmem:[%s165 + $0x58] sm:$0xff]
      %v183 = vld [vmem:[%s165 + $0x60] sm:$0xff]
      %v184 = vld [vmem:[%s165 + $0x68] sm:$0xff]
      %v185 = vld [vmem:[%s165 + $0x70] sm:$0xff]
      %v186 = vld [vmem:[%s165 + $0x78] sm:$0xff]
      %v187 = vadd.f32 %v171, %v172
      %188 = vadd.xlane.f32.xlu0 %v187
      %v189 = vpop.xlane.xlu0 %188
      %v190 = vadd.f32 %v173, %v174
      %191 = vadd.xlane.f32.xlu0 %v190
      %v192 = vpop.xlane.xlu0 %191
      %v193 = vadd.f32 %v175, %v176
      %194 = vadd.xlane.f32.xlu0 %v193
      %v195 = vpop.xlane.xlu0 %194
      %v196 = vadd.f32 %v177, %v178
      %197 = vadd.xlane.f32.xlu0 %v196
      %v198 = vpop.xlane.xlu0 %197
      %v199 = vadd.f32 %v179, %v180
      %200 = vadd.xlane.f32.xlu0 %v199
      %v201 = vpop.xlane.xlu0 %200
      %v202 = vadd.f32 %v181, %v182
      %203 = vadd.xlane.f32.xlu0 %v202
      %v204 = vpop.xlane.xlu0 %203
      %v205 = vadd.f32 %v183, %v184
      %206 = vadd.xlane.f32.xlu0 %v205
      %v207 = vpop.xlane.xlu0 %206
      %v208 = vadd.f32 %v185, %v186
      %209 = vadd.xlane.f32.xlu0 %v208
      %v210 = vpop.xlane.xlu0 %209
      %v211 = vmul.f32 %v189, 0.00390625
      %v212 = vmul.f32 %v192, 0.00390625
      %v213 = vmul.f32 %v195, 0.00390625
      %v214 = vmul.f32 %v198, 0.00390625
      %v215 = vmul.f32 %v201, 0.00390625
      %v216 = vmul.f32 %v204, 0.00390625
      %v217 = vmul.f32 %v207, 0.00390625
      %v218 = vmul.f32 %v210, 0.00390625
      %v219 = vmax.f32 %v171, %v172
      %220 = vmax.xlane.f32.xlu0 %v219
      %v221 = vpop.xlane.xlu0 %220
      %v222 = vmax.f32 %v173, %v174
      %223 = vmax.xlane.f32.xlu0 %v222
      %v224 = vpop.xlane.xlu0 %223
      %v225 = vmax.f32 %v175, %v176
      %226 = vmax.xlane.f32.xlu0 %v225
      %v227 = vpop.xlane.xlu0 %226
      %v228 = vmax.f32 %v177, %v178
      %229 = vmax.xlane.f32.xlu0 %v228
      %v230 = vpop.xlane.xlu0 %229
      %v231 = vmax.f32 %v179, %v180
      %232 = vmax.xlane.f32.xlu0 %v231
      %v233 = vpop.xlane.xlu0 %232
      %v234 = vmax.f32 %v181, %v182
      %235 = vmax.xlane.f32.xlu0 %v234
      %v236 = vpop.xlane.xlu0 %235
      %v237 = vmax.f32 %v183, %v184
      %238 = vmax.xlane.f32.xlu0 %v237
      %v239 = vpop.xlane.xlu0 %238
      %v240 = vmax.f32 %v185, %v186
      %241 = vmax.xlane.f32.xlu0 %v240
      %v242 = vpop.xlane.xlu0 %241
      %vm243 = vcmask 7168
      %v244 = vsel %vm243, %v211, %v221
      %v245 = vsel %vm243, %v212, %v224
      %v246 = vsel %vm243, %v213, %v227
      %v247 = vsel %vm243, %v214, %v230
      %v248 = vsel %vm243, %v215, %v233
      %v249 = vsel %vm243, %v216, %v236
      %v250 = vsel %vm243, %v217, %v239
      %v251 = vsel %vm243, %v218, %v242
      %v252 = vld [vmem:[%s1] sm:$0xf]
      %vm253 = vcmask 523264
      %v255 = vsel %vm253, %v252, 0
      %257 = vmatpush.msra.mxu0 0.0
      %258 = vmatpush.msra.mxu0 0.0
      %259 = vmatpush.msra.mxu0 0.0
      %260 = vmatpush.msra.mxu0 0.0
      %261 = vmatpush.msra.mxu0 0.0
      %262 = vmatpush.msra.mxu0 0.0
      %263 = vmatpush.msra.mxu0 0.0
      %264 = vmatpush.msra.mxu0 0.0
      %265 = vmatpush.msra.mxu0 %v251
      %266 = vmatpush.msra.mxu0 %v250
      %267 = vmatpush.msra.mxu0 %v249
      %268 = vmatpush.msra.mxu0 %v248
      %269 = vmatpush.msra.mxu0 %v247
      %270 = vmatpush.msra.mxu0 %v246
      %271 = vmatpush.msra.mxu0 %v245
      %272 = vmatpush.msra.mxu0 %v244
      %273 = vmatmul.f32.gmra.mxu0 %v255
      %v274 = vpop.f32.mrf.mxu0
      %v275 = vadd.f32 0.0, %v274
      %276 = vdwg.mxu0
      %v277 = vmax.f32 %v275, 0.0
      %v278 = vld [vmem:[%s2] sm:$0xff]
      %v279 = vld [vmem:[%s2 + $0x8] sm:$0xff]
      %v280 = vld [vmem:[%s2 + $0x10] sm:$0xff]
      %v281 = vld [vmem:[%s2 + $0x18] sm:$0xff]
      %v282 = vld [vmem:[%s2 + $0x20] sm:$0xff]
      %v283 = vld [vmem:[%s2 + $0x28] sm:$0xff]
      %v284 = vld [vmem:[%s2 + $0x30] sm:$0xff]
      %v285 = vld [vmem:[%s2 + $0x38] sm:$0xff]
      %vm286 = vcmask 31744
      %v288 = vsel %vm286, %v278, 0
      %v291 = vsel %vm286, %v279, 0
      %v294 = vsel %vm286, %v280, 0
      %v297 = vsel %vm286, %v281, 0
      %v300 = vsel %vm286, %v282, 0
      %v303 = vsel %vm286, %v283, 0
      %v306 = vsel %vm286, %v284, 0
      %v309 = vsel %vm286, %v285, 0
      %vm311 = vcmask 1043456
      %v313 = vsel %vm311, %v277, 0
      %315 = vmatpush.msra.mxu0 0.0
      %316 = vmatpush.msra.mxu0 0.0
      %317 = vmatpush.msra.mxu0 0.0
      %318 = vmatpush.msra.mxu0 0.0
      %319 = vmatpush.msra.mxu0 0.0
      %320 = vmatpush.msra.mxu0 0.0
      %321 = vmatpush.msra.mxu0 0.0
      %322 = vmatpush.msra.mxu0 0.0
      %323 = vmatpush.msra.mxu0 0.0
      %324 = vmatpush.msra.mxu0 0.0
      %325 = vmatpush.msra.mxu0 0.0
      %326 = vmatpush.msra.mxu0 0.0
      %327 = vmatpush.msra.mxu0 0.0
      %328 = vmatpush.msra.mxu0 0.0
      %329 = vmatpush.msra.mxu0 0.0
      %330 = vmatpush.msra.mxu0 %v313
      %331 = vmatmul.f32.gmra.mxu0 %v288
      %v332 = vpop.f32.mrf.mxu0
      %v333 = vadd.f32 0.0, %v332
      %334 = vmatmul.f32.gmra.mxu0 %v291
      %v335 = vpop.f32.mrf.mxu0
      %v336 = vadd.f32 0.0, %v335
      %337 = vmatmul.f32.gmra.mxu0 %v294
      %v338 = vpop.f32.mrf.mxu0
      %v339 = vadd.f32 0.0, %v338
      %340 = vmatmul.f32.gmra.mxu0 %v297
      %v341 = vpop.f32.mrf.mxu0
      %v342 = vadd.f32 0.0, %v341
      %343 = vmatmul.f32.gmra.mxu0 %v300
      %v344 = vpop.f32.mrf.mxu0
      %v345 = vadd.f32 0.0, %v344
      %346 = vmatmul.f32.gmra.mxu0 %v303
      %v347 = vpop.f32.mrf.mxu0
      %v348 = vadd.f32 0.0, %v347
      %349 = vmatmul.f32.gmra.mxu0 %v306
      %v350 = vpop.f32.mrf.mxu0
      %v351 = vadd.f32 0.0, %v350
      %352 = vmatmul.f32.gmra.mxu0 %v309
      %v353 = vpop.f32.mrf.mxu0
      %v354 = vadd.f32 0.0, %v353
      %355 = vdwg.mxu0
      %364 = vrot.lane.b32.xlu0 %v333, 127
      %v365 = vpop.permute.xlu0 %364
      %366 = vrot.lane.b32.xlu0 %v336, 127
      %v367 = vpop.permute.xlu0 %366
      %368 = vrot.lane.b32.xlu0 %v339, 127
      %v369 = vpop.permute.xlu0 %368
      %370 = vrot.lane.b32.xlu0 %v342, 127
      %v371 = vpop.permute.xlu0 %370
      %372 = vrot.lane.b32.xlu0 %v345, 127
      %v373 = vpop.permute.xlu0 %372
      %374 = vrot.lane.b32.xlu0 %v348, 127
      %v375 = vpop.permute.xlu0 %374
      %376 = vrot.lane.b32.xlu0 %v351, 127
      %v377 = vpop.permute.xlu0 %376
      %378 = vrot.lane.b32.xlu0 %v354, 127
      %v379 = vpop.permute.xlu0 %378
      %v388 = vadd.f32 %v333, %v365
      %v389 = vadd.f32 %v336, %v367
      %v390 = vadd.f32 %v339, %v369
      %v391 = vadd.f32 %v342, %v371
      %v392 = vadd.f32 %v345, %v373
      %v393 = vadd.f32 %v348, %v375
      %v394 = vadd.f32 %v351, %v377
      %v395 = vadd.f32 %v354, %v379
      %v396 = vxor.u32 %v388, 2147483648
      %v397 = vxor.u32 %v389, 2147483648
      %v398 = vxor.u32 %v390, 2147483648
      %v399 = vxor.u32 %v391, 2147483648
      %v400 = vxor.u32 %v392, 2147483648
      %v401 = vxor.u32 %v393, 2147483648
      %v402 = vxor.u32 %v394, 2147483648
      %v403 = vxor.u32 %v395, 2147483648
      %v404 = vmul.f32 %v396, 1.442695
      %v405 = vpow.pop %v404
      %v406 = vmul.f32 %v397, 1.442695
      %v407 = vpow.pop %v406
      %v408 = vmul.f32 %v398, 1.442695
      %v409 = vpow.pop %v408
      %v410 = vmul.f32 %v399, 1.442695
      %v411 = vpow.pop %v410
      %v412 = vmul.f32 %v400, 1.442695
      %v413 = vpow.pop %v412
      %v414 = vmul.f32 %v401, 1.442695
      %v415 = vpow.pop %v414
      %v416 = vmul.f32 %v402, 1.442695
      %v417 = vpow.pop %v416
      %v418 = vmul.f32 %v403, 1.442695
      %v419 = vpow.pop %v418
      %v420 = vadd.f32 %v405, 1.0
      %v421 = vadd.f32 %v407, 1.0
      %v422 = vadd.f32 %v409, 1.0
      %v423 = vadd.f32 %v411, 1.0
      %v424 = vadd.f32 %v413, 1.0
      %v425 = vadd.f32 %v415, 1.0
      %v426 = vadd.f32 %v417, 1.0
      %v427 = vadd.f32 %v419, 1.0
      %v428 = vrcp.pop %v420
      %v429 = vmul.f32 %v420, %v428
      %v430 = vsub.f32 1.0, %v429
      %v431 = vmul.f32 %v428, %v430
      %v432 = vadd.f32 %v428, %v431
      %vm433 = vweird.f32 %v420
      %vm434 = vweird.f32 %v428
      %vm435 = vmor %vm433, %vm434
      %v436 = vsel %vm435, %v428, %v432
      %v437 = vand.u32 2147483647, %v420
      %vm438 = vcmp.eq.f32.partialorder %v437, 8.507059e+37
      %v439 = vand.u32 %v420, 2147483648
      %v440 = vor.u32 1.1754944e-38, %v439
      %v441 = vsel %vm438, %v440, %v436
      %v442 = vmul.f32 1.0, %v441
      %v443 = vrcp.pop %v421
      %v444 = vmul.f32 %v421, %v443
      %v445 = vsub.f32 1.0, %v444
      %v446 = vmul.f32 %v443, %v445
      %v447 = vadd.f32 %v443, %v446
      %vm448 = vweird.f32 %v421
      %vm449 = vweird.f32 %v443
      %vm450 = vmor %vm448, %vm449
      %v451 = vsel %vm450, %v443, %v447
      %v452 = vand.u32 2147483647, %v421
      %vm453 = vcmp.eq.f32.partialorder %v452, 8.507059e+37
      %v454 = vand.u32 %v421, 2147483648
      %v455 = vor.u32 1.1754944e-38, %v454
      %v456 = vsel %vm453, %v455, %v451
      %v457 = vmul.f32 1.0, %v456
      %v458 = vrcp.pop %v422
      %v459 = vmul.f32 %v422, %v458
      %v460 = vsub.f32 1.0, %v459
      %v461 = vmul.f32 %v458, %v460
      %v462 = vadd.f32 %v458, %v461
      %vm463 = vweird.f32 %v422
      %vm464 = vweird.f32 %v458
      %vm465 = vmor %vm463, %vm464
      %v466 = vsel %vm465, %v458, %v462
      %v467 = vand.u32 2147483647, %v422
      %vm468 = vcmp.eq.f32.partialorder %v467, 8.507059e+37
      %v469 = vand.u32 %v422, 2147483648
      %v470 = vor.u32 1.1754944e-38, %v469
      %v471 = vsel %vm468, %v470, %v466
      %v472 = vmul.f32 1.0, %v471
      %v473 = vrcp.pop %v423
      %v474 = vmul.f32 %v423, %v473
      %v475 = vsub.f32 1.0, %v474
      %v476 = vmul.f32 %v473, %v475
      %v477 = vadd.f32 %v473, %v476
      %vm478 = vweird.f32 %v423
      %vm479 = vweird.f32 %v473
      %vm480 = vmor %vm478, %vm479
      %v481 = vsel %vm480, %v473, %v477
      %v482 = vand.u32 2147483647, %v423
      %vm483 = vcmp.eq.f32.partialorder %v482, 8.507059e+37
      %v484 = vand.u32 %v423, 2147483648
      %v485 = vor.u32 1.1754944e-38, %v484
      %v486 = vsel %vm483, %v485, %v481
      %v487 = vmul.f32 1.0, %v486
      %v488 = vrcp.pop %v424
      %v489 = vmul.f32 %v424, %v488
      %v490 = vsub.f32 1.0, %v489
      %v491 = vmul.f32 %v488, %v490
      %v492 = vadd.f32 %v488, %v491
      %vm493 = vweird.f32 %v424
      %vm494 = vweird.f32 %v488
      %vm495 = vmor %vm493, %vm494
      %v496 = vsel %vm495, %v488, %v492
      %v497 = vand.u32 2147483647, %v424
      %vm498 = vcmp.eq.f32.partialorder %v497, 8.507059e+37
      %v499 = vand.u32 %v424, 2147483648
      %v500 = vor.u32 1.1754944e-38, %v499
      %v501 = vsel %vm498, %v500, %v496
      %v502 = vmul.f32 1.0, %v501
      %v503 = vrcp.pop %v425
      %v504 = vmul.f32 %v425, %v503
      %v505 = vsub.f32 1.0, %v504
      %v506 = vmul.f32 %v503, %v505
      %v507 = vadd.f32 %v503, %v506
      %vm508 = vweird.f32 %v425
      %vm509 = vweird.f32 %v503
      %vm510 = vmor %vm508, %vm509
      %v511 = vsel %vm510, %v503, %v507
      %v512 = vand.u32 2147483647, %v425
      %vm513 = vcmp.eq.f32.partialorder %v512, 8.507059e+37
      %v514 = vand.u32 %v425, 2147483648
      %v515 = vor.u32 1.1754944e-38, %v514
      %v516 = vsel %vm513, %v515, %v511
      %v517 = vmul.f32 1.0, %v516
      %v518 = vrcp.pop %v426
      %v519 = vmul.f32 %v426, %v518
      %v520 = vsub.f32 1.0, %v519
      %v521 = vmul.f32 %v518, %v520
      %v522 = vadd.f32 %v518, %v521
      %vm523 = vweird.f32 %v426
      %vm524 = vweird.f32 %v518
      %vm525 = vmor %vm523, %vm524
      %v526 = vsel %vm525, %v518, %v522
      %v527 = vand.u32 2147483647, %v426
      %vm528 = vcmp.eq.f32.partialorder %v527, 8.507059e+37
      %v529 = vand.u32 %v426, 2147483648
      %v530 = vor.u32 1.1754944e-38, %v529
      %v531 = vsel %vm528, %v530, %v526
      %v532 = vmul.f32 1.0, %v531
      %v533 = vrcp.pop %v427
      %v534 = vmul.f32 %v427, %v533
      %v535 = vsub.f32 1.0, %v534
      %v536 = vmul.f32 %v533, %v535
      %v537 = vadd.f32 %v533, %v536
      %vm538 = vweird.f32 %v427
      %vm539 = vweird.f32 %v533
      %vm540 = vmor %vm538, %vm539
      %v541 = vsel %vm540, %v533, %v537
      %v542 = vand.u32 2147483647, %v427
      %vm543 = vcmp.eq.f32.partialorder %v542, 8.507059e+37
      %v544 = vand.u32 %v427, 2147483648
      %v545 = vor.u32 1.1754944e-38, %v544
      %v546 = vsel %vm543, %v545, %v541
      %v547 = vmul.f32 1.0, %v546
      %548 = vst.msk [vmem:[%s170] sm:$0xff] %vm243, %v442
      %549 = vst.msk [vmem:[%s170 + $0x8] sm:$0xff] %vm243, %v457
      %550 = vst.msk [vmem:[%s170 + $0x10] sm:$0xff] %vm243, %v472
      %551 = vst.msk [vmem:[%s170 + $0x18] sm:$0xff] %vm243, %v487
      %552 = vst.msk [vmem:[%s170 + $0x20] sm:$0xff] %vm243, %v502
      %553 = vst.msk [vmem:[%s170 + $0x28] sm:$0xff] %vm243, %v517
      %554 = vst.msk [vmem:[%s170 + $0x30] sm:$0xff] %vm243, %v532
      %555 = vst.msk [vmem:[%s170 + $0x38] sm:$0xff] %vm243, %v547
      %p556 = scmp.lt.s32.totalorder %s14, 1
      %s557 = scalar_select %p556, %s14, 1
      %s558 = smul.addr %s557, 8
      %s559 = smul.addr %s558, 8
      %s560 = scalar_lea.vmem %s3, %s559
      // Predicated region
      $region33: #{channel_attention_forward.1} parent=31 // pred_check
        %p561 = pneg %p100
      $region34: #{channel_attention_forward.1} parent=31 // pred_check_branch
        %563 = sbr.rel (%p561) target = $region36
      $region35: #{channel_attention_forward.1} parent=31 // pred_region
        _
      $region36: #{channel_attention_forward.1} parent=31 // pred_fallthru
        _
    $region32: #{channel_attention_forward.1} parent=5 // pred_fallthru
      _
    %p564 = scmp.le.s32.totalorder 2, %s9
    // Predicated region
    $region37: #{channel_attention_forward.1} parent=5 // pred_check
      %p565 = pneg %p564
    $region38: #{channel_attention_forward.1} parent=5 // pred_check_branch
      %567 = sbr.rel (%p565) target = $region40
    $region39: #{channel_attention_forward.1} parent=5 // pred_region
      %s568 = ssub.s32 %s9, 2
      // Predicated region
      $region41: #{channel_attention_forward.1} parent=39 // pred_check
        %p569 = pneg %p106
      $region42: #{channel_attention_forward.1} parent=39 // pred_check_branch
        %571 = sbr.rel (%p569) target = $region44
      $region43: #{channel_attention_forward.1} parent=39 // pred_region
        %p572 = scmp.lt.s32.totalorder %s15, 1
        %s573 = scalar_select %p572, %s15, 1
        %s574 = smul.addr %s573, 8
        %s575 = smul.addr %s574, 8
        %s576 = scalar_lea.vmem %s3, %s575
      $region44: #{channel_attention_forward.1} parent=39 // pred_fallthru
        _
    $region40: #{channel_attention_forward.1} parent=5 // pred_fallthru
      _
  $region6: #{channel_attention_forward.1} parent=0 // loop_footer
    %s13 = sadd.s32 1, %s9
  $region7: #{channel_attention_forward.1} parent=0 // loop_footer_branch
    %8 = sbr.rel target = $region3
  $region8: #{channel_attention_forward.1} parent=0 // loop_exit
    _

</llo_original>
